<compile_context>
chip_gen: v7x
topology: tpu7x:2x2x1
jax: 0.10.0
libtpu: 0.0.40
codegen_flags: <defaults>
</compile_context>

<pallas_src>
import jax
import jax.numpy as jnp
from jax.experimental import pallas as pl
from jax.experimental.pallas import tpu as pltpu


def _unsqueezed_shape(shape, dims, n_unsqueezes):
    """Replicate torch's iterative x.unsqueeze(dim=dim) shape semantics."""
    shape = list(shape)
    for dim, times in zip(dims, n_unsqueezes):
        for _ in range(times):
            d = dim
            if d < 0:
                d = len(shape) + 1 + d  # torch negative-dim convention
            shape.insert(d, 1)
    return tuple(shape)


def _hbm_copy_kernel(x_hbm_ref, o_hbm_ref):
    """Single whole-array HBM->HBM DMA (no VMEM staging, no grid)."""
    def body(sem):
        copy = pltpu.make_async_copy(x_hbm_ref, o_hbm_ref, sem)
        copy.start()
        copy.wait()

    pl.run_scoped(body, pltpu.SemaphoreType.DMA)


def _pallas_contiguous_copy(x):
    """Materialize a fresh contiguous copy of `x` with one DMA."""
    return pl.pallas_call(
        _hbm_copy_kernel,
        out_shape=jax.ShapeDtypeStruct(x.shape, x.dtype),
        in_specs=[pl.BlockSpec(memory_space=pl.ANY)],
        out_specs=pl.BlockSpec(memory_space=pl.ANY),
    )(x)


def unsqueeze_forward(x, dims, n_unsqueezes, *, force_copy=False):
    """Pallas-backed equivalent of Unsqueeze(dims, n_unsqueezes)(x).

    Default path is metadata-only (jnp.reshape).  Set force_copy=True to
    additionally produce a physically fresh buffer via the Pallas DMA kernel.
    """
    out_shape = _unsqueezed_shape(x.shape, dims, n_unsqueezes)
    if force_copy:
        x = _pallas_contiguous_copy(x)
    # Inserting singleton axes is a pure reshape (no data movement in XLA).
    return jnp.reshape(x, out_shape)


if __name__ == "__main__":
    key = jax.random.PRNGKey(0)
    # Small NCHW-like input: batch=2, channels=4, spatial=16x16.
    x = jax.random.normal(key, (2, 4, 16, 16), dtype=jnp.float32)

    # Example module config: unsqueeze twice at dim 1 and once at dim -1.
    dims = (1, -1)
    n_unsqueezes = (2, 1)
    expected_shape = (2, 1, 1, 4, 16, 16, 1)

    # Fast path: metadata-only reshape (the recommended implementation).
    y_meta = unsqueeze_forward(x, dims, n_unsqueezes)
    y_meta = jax.block_until_ready(y_meta)
    assert y_meta.shape == expected_shape, (y_meta.shape, expected_shape)
    assert jnp.array_equal(y_meta.reshape(x.shape), x)

    # Pallas path: fresh contiguous buffer via a single HBM->HBM DMA.
    y_copy = unsqueeze_forward(x, dims, n_unsqueezes, force_copy=True)
    y_copy = jax.block_until_ready(y_copy)
    assert y_copy.shape == expected_shape, (y_copy.shape, expected_shape)
    assert jnp.array_equal(y_copy.reshape(x.shape), x)

    print("KERNEL_OK")
</pallas_src>

<mosaic_0001>
module attributes {stable_mosaic.version = 11 : i64} {
  func.func @_hbm_copy_kernel(%arg0: memref<2x4x16x16xf32, #tpu.memory_space<any>>, %arg1: memref<2x4x16x16xf32, #tpu.memory_space<any>>) attributes {dimension_semantics = [], scalar_prefetch = 0 : i64, scratch_operands = 0 : i64, tpu.core_type = #tpu.core_type<tc>} {
    "tpu.region"() ({
      %0 = tpu.sem_alloc : memref<!tpu.dma_semaphore, #tpu.memory_space<semaphore_mem>>
      tpu.enqueue_dma source(%arg0 : memref<2x4x16x16xf32, #tpu.memory_space<any>>) target(%arg1 : memref<2x4x16x16xf32, #tpu.memory_space<any>>) target_semaphore(%0 : memref<!tpu.dma_semaphore, #tpu.memory_space<semaphore_mem>>)
      tpu.wait_dma2 semaphore(%0 : memref<!tpu.dma_semaphore, #tpu.memory_space<semaphore_mem>>) src(%arg0 : memref<2x4x16x16xf32, #tpu.memory_space<any>>) dst(%arg1 : memref<2x4x16x16xf32, #tpu.memory_space<any>>)
      tpu.yield
    }) : () -> ()
    return
  }
}

</mosaic_0001>

<llo_original>
// kernel: tpu_custom_call.1
$region0: #{tpu_custom_call.1}
  #allocation0 [shape = 'u32[]', space=smem, size = 0x4, offset = 0x4, fixed_abs, tag = 'smem constant byte address 0x4 - core index']
  #allocation1 [shape = 'u32[144,128]{1,0:T(1,128)}', space=vmem, size = 0x12000, scoped, tag = 'internal scratch']
  #allocation3 [shape = 's32[]', space=sflag, size = 0x4, offset = 0, fixed_abs, tag = 'sflag constant byte address 0x0 - dummy sync flag']
  #allocation4 [shape = 'u32[0]{0}', space=smem, size = 0, offset = 0, fixed_abs, tag = 'smem constant byte address 0x0 - null']
  %s0 = inlined_call_operand.hbm [shape: f32[2,4,16,16], index: 0, kind: input, shape index: {}]
  %s1 = inlined_call_operand.hbm [shape: f32[2,4,16,16], index: 1, kind: output, shape index: {}]
  %s2 = sld [smem:[#allocation0]]
  $region3: #{tpu_custom_call.1} parent=0
    _
  %s4 = ssub.s32 1, %s2
  %s5 = scalar_select 0, %s4, %s2
  $region2: #{tpu_custom_call.1} parent=0
    #allocation2 [shape = 's32[1]{0}', space=sflag, size = 0x4, scoped, tag = 'scoped memory for tpu_custom_call.1']
    %s7 = sshll.u32 1, 14
    %s8 = sxor.u32 4294967295, %s7
    %s11 = sshll.u32 3, 24
    %s12 = sxor.u32 4294967295, %s11
    %s13 = sand.u32 0, %s12
    %s15 = sor.u32 %s13, 0
    %18 = dma.general %s0, 2048, %s1, [#allocation2], [#allocation3], [#allocation4], %s15, 0
    %s19 = smul.u32 2, 4
    %s20 = smul.u32 %s19, 16
    %s21 = smul.u32 %s20, 1
    %s22 = sshll.u32 %s21, 4
    %23 = dma.done [#allocation2], %s22

</llo_original>
